<compile_context>
chip_gen: v7x
topology: tpu7x:2x2x1
jax: 0.10.0
libtpu: 0.0.40
codegen_flags: <defaults>
</compile_context>

<pallas_src>
import math

import jax
import jax.numpy as jnp
from jax.experimental import pallas as pl
from jax.experimental.pallas import tpu as pltpu  # noqa: F401  (TPU backend import)

# ---------------- small shapes consistent with the module ----------------
D_MODEL = 128        # embed dim (lane-dense: multiple of 128)
MAX_LEN = 5000       # module default max_len
SEQ = 8              # sequence length of the example input
BATCH = 8            # batch size of the example input
DROPOUT_P = 0.2      # module-level dropout value (identity at inference)


# ---------------- pe buffer construction (== module __init__) ----------------
def make_pe_buffer(max_len: int, d_model: int) -> jnp.ndarray:
    """Returns pe of shape (max_len, d_model), float32."""
    position = jnp.arange(max_len, dtype=jnp.float32)[:, None]                 # (L, 1)
    div_term = jnp.exp(jnp.arange(0, d_model, 2, dtype=jnp.float32)
                       * (-math.log(10000.0) / d_model))                       # (D/2,)
    angles = position * div_term                                               # (L, D/2)
    pe = jnp.zeros((max_len, d_model), jnp.float32)
    pe = pe.at[:, 0::2].set(jnp.sin(angles))
    pe = pe.at[:, 1::2].set(jnp.cos(angles))
    return pe


# ---------------- fused positional-encoding kernel ----------------
def pos_encoding_kernel(x_ref, pe_ref, o_ref):
    # x: (S, B, D); pe: (S, D) -> broadcast over batch (sublane broadcast).
    x = x_ref[...]                        # (S, B, D)
    pe = pe_ref[...]                      # (S, D)
    y = x + pe[:, None, :]                # broadcast add over B
    # dropout = identity (inference mode)
    o_ref[...] = y.astype(o_ref.dtype)


def positional_encoding(x, pe_buffer):
    """x: (S, B, D) float32; pe_buffer: (max_len, D) float32."""
    S, B, D = x.shape
    pe_slice = pe_buffer[:S]              # (S, D) — only the needed rows go to VMEM
    return pl.pallas_call(
        pos_encoding_kernel,
        out_shape=jax.ShapeDtypeStruct((S, B, D), x.dtype),
        in_specs=[
            pl.BlockSpec((S, B, D), lambda: (0, 0, 0)),
            pl.BlockSpec((S, D), lambda: (0, 0)),
        ],
        out_specs=pl.BlockSpec((S, B, D), lambda: (0, 0, 0)),
    )(x, pe_slice)


@jax.jit
def pos_encoder_forward(x, pe_buffer):
    return positional_encoding(x, pe_buffer)


# ---------------- reference (pure JAX) for a sanity check ----------------
def pos_encoder_reference(x, pe_buffer):
    S = x.shape[0]
    return x + pe_buffer[:S][:, None, :]


if __name__ == "__main__":
    key = jax.random.PRNGKey(0)

    # "register_buffer('pe', ...)" equivalent: built once, reused every forward.
    pe_buffer = make_pe_buffer(MAX_LEN, D_MODEL)

    # example input: [sequence length, batch size, embed dim]
    x = jax.random.normal(key, (SEQ, BATCH, D_MODEL), jnp.float32)

    out = pos_encoder_forward(x, pe_buffer)
    jax.block_until_ready(out)

    assert out.shape == (SEQ, BATCH, D_MODEL)
    ref = pos_encoder_reference(x, pe_buffer)
    assert jnp.allclose(out, ref, atol=1e-6, rtol=1e-6)

    print("KERNEL_OK")
</pallas_src>

<mosaic_0001>
module attributes {stable_mosaic.version = 11 : i64} {
  func.func @pos_encoding_kernel(%arg0: memref<8x8x128xf32, #tpu.memory_space<vmem>>, %arg1: memref<8x128xf32, #tpu.memory_space<vmem>>, %arg2: memref<8x8x128xf32, #tpu.memory_space<vmem>>) attributes {dimension_semantics = [], scalar_prefetch = 0 : i64, scratch_operands = 0 : i64, tpu.core_type = #tpu.core_type<tc>} {
    %c0 = arith.constant 0 : index
    %c0_0 = arith.constant 0 : index
    %c0_1 = arith.constant 0 : index
    %0 = vector.load %arg0[%c0, %c0_0, %c0_1] : memref<8x8x128xf32, #tpu.memory_space<vmem>>, vector<8x8x128xf32>
    %c0_2 = arith.constant 0 : index
    %c0_3 = arith.constant 0 : index
    %1 = vector.load %arg1[%c0_2, %c0_3] : memref<8x128xf32, #tpu.memory_space<vmem>>, vector<8x128xf32>
    %2 = vector.shape_cast %1 : vector<8x128xf32> to vector<8x1x128xf32>
    %3 = vector.broadcast %2 : vector<8x1x128xf32> to vector<8x8x128xf32>
    %4 = arith.addf %0, %3 : vector<8x8x128xf32>
    %c0_4 = arith.constant 0 : index
    %c0_5 = arith.constant 0 : index
    %c0_6 = arith.constant 0 : index
    %5 = vector.load %arg2[%c0_4, %c0_5, %c0_6] : memref<8x8x128xf32, #tpu.memory_space<vmem>>, vector<8x8x128xf32>
    tpu.vector_store %arg2[%c0_4, %c0_5, %c0_6], %4 {strides = array<i32>} : memref<8x8x128xf32, #tpu.memory_space<vmem>>, vector<8x8x128xf32>,
    return
  }
}

</mosaic_0001>

<llo_original>
// kernel: pos_encoder_forward.1
$region0: #{pos_encoder_forward.1}
  #allocation0 [shape = 'u32[]', space=smem, size = 0x4, offset = 0x4, fixed_abs, tag = 'smem constant byte address 0x4 - core index']
  #allocation1 [shape = 'u32[144,128]{1,0:T(1,128)}', space=vmem, size = 0x12000, scoped, tag = 'internal scratch']
  %s0 = inlined_call_operand.hbm [shape: f32[8,8,128], index: 0, kind: input, shape index: {}]
  %s1 = inlined_call_operand.vmem [shape: f32[8,128], index: 1, kind: input, shape index: {}]
  %s2 = inlined_call_operand.hbm [shape: f32[8,8,128], index: 2, kind: output, shape index: {}]
  %s3 = sld [smem:[#allocation0]]
  $region22: #{pos_encoder_forward.1} parent=0
    _
  %s5 = ssub.s32 1, %s3
  %s6 = scalar_select 0, %s5, %s3
  $region1: #{pos_encoder_forward.1} parent=0
    #allocation2 [shape = 'u8[32768]{0}', space=vmem, size = 0x8000, scoped, tag = 'input window, operand 0, single buffered']
    #allocation3 [shape = 's32[1]{0}', space=sflag, size = 0x4, scoped, tag = 'scoped memory for pos_encoder_forward.1']
    #allocation4 [shape = 's32[1]{0}', space=sflag, size = 0x4, scoped, tag = 'scoped memory for pos_encoder_forward.1']
    #allocation5 [shape = 'u8[32768]{0}', space=vmem, size = 0x8000, scoped, tag = 'output window, operand 0, single buffered']
    %7 = vsyncpa [#allocation3], 0
    %8 = vsyncpa [#allocation4], 0
    // Predicated region
    $region2: #{pos_encoder_forward.1} parent=1 // pred_check
      _
    $region3: #{pos_encoder_forward.1} parent=1 // pred_check_branch
      %10 = sbr.rel (0) target = $region5
    $region4: #{pos_encoder_forward.1} parent=1 // pred_region
      %s12 = ssub.s32 1024, 1024
      %13 = vsyncadd [#allocation3], %s12
      %s14 = sshll.u32 [#allocation2], 4
      %s15 = int_to_ptr.vmem [resolvable:$true] %s14
      %20 = dma.hbm_to_vmem [thread:$0]  %s0, 1024, %s15, [#allocation3], 128, 128, 8
    $region5: #{pos_encoder_forward.1} parent=1 // pred_fallthru
      _
    // Predicated region
    $region6: #{pos_encoder_forward.1} parent=1 // pred_check
      _
    $region7: #{pos_encoder_forward.1} parent=1 // pred_check_branch
      %22 = sbr.rel (0) target = $region9
    $region8: #{pos_encoder_forward.1} parent=1 // pred_region
      _
    $region9: #{pos_encoder_forward.1} parent=1 // pred_fallthru
      _
    // Predicated region
    $region10: #{pos_encoder_forward.1} parent=1 // pred_check
      _
    $region11: #{pos_encoder_forward.1} parent=1 // pred_check_branch
      %24 = sbr.rel (0) target = $region13
    $region12: #{pos_encoder_forward.1} parent=1 // pred_region
      %25 = dma.done [#allocation3], 1024
    $region13: #{pos_encoder_forward.1} parent=1 // pred_fallthru
      _
    %v26 = vld [vmem:[#allocation2] sm:$0xff]
    %v27 = vld [vmem:[#allocation2 + $0x8] sm:$0xff]
    %v28 = vld [vmem:[#allocation2 + $0x10] sm:$0xff]
    %v29 = vld [vmem:[#allocation2 + $0x18] sm:$0xff]
    %v30 = vld [vmem:[#allocation2 + $0x20] sm:$0xff]
    %v31 = vld [vmem:[#allocation2 + $0x28] sm:$0xff]
    %v32 = vld [vmem:[#allocation2 + $0x30] sm:$0xff]
    %v33 = vld [vmem:[#allocation2 + $0x38] sm:$0xff]
    %v34 = vld [vmem:[%s1] sm:$0xff]
    %v36 = vcombine.high %v34, %v34
    %v38 = vunpack.c.l.s4 1966171168
    %v39 = vunpack.c.0.s8 %v38
    %v40 = vlaneseq
    %v41 = vshrl.u32 %v40, 7
    %v42 = vsub.s32 %v39, %v41
    %v43 = vrot.slane %v34, %v42
    %v45 = vunpack.c.l.s4 1966171168
    %v46 = vunpack.c.0.s8 %v45
    %v47 = vlaneseq
    %v48 = vshrl.u32 %v47, 7
    %v49 = vsub.s32 %v46, %v48
    %v50 = vrot.slane %v36, %v49
    %v51 = vcombine.high %v43, %v43
    %v52 = vcombine.high %v50, %v50
    %v54 = vunpack.c.l.s4 1966171168
    %v55 = vunpack.c.0.s8 %v54
    %v56 = vlaneseq
    %v57 = vshrl.u32 %v56, 7
    %v58 = vsub.s32 %v55, %v57
    %v59 = vrot.slane %v43, %v58
    %v61 = vunpack.c.l.s4 1966171168
    %v62 = vunpack.c.0.s8 %v61
    %v63 = vlaneseq
    %v64 = vshrl.u32 %v63, 7
    %v65 = vsub.s32 %v62, %v64
    %v66 = vrot.slane %v50, %v65
    %v68 = vunpack.c.l.s4 1966171168
    %v69 = vunpack.c.0.s8 %v68
    %v70 = vlaneseq
    %v71 = vshrl.u32 %v70, 7
    %v72 = vsub.s32 %v69, %v71
    %v73 = vrot.slane %v51, %v72
    %v75 = vunpack.c.l.s4 1966171168
    %v76 = vunpack.c.0.s8 %v75
    %v77 = vlaneseq
    %v78 = vshrl.u32 %v77, 7
    %v79 = vsub.s32 %v76, %v78
    %v80 = vrot.slane %v52, %v79
    %v81 = vcombine.high %v59, %v59
    %v82 = vcombine.high %v66, %v66
    %v83 = vcombine.high %v73, %v73
    %v84 = vcombine.high %v80, %v80
    %v85 = vlaneseq
    %v86 = vshrl.u32 %v85, 7
    %v87 = vsub.s32 0, %v86
    %v88 = vrot.slane %v59, %v87
    %v89 = vlaneseq
    %v90 = vshrl.u32 %v89, 7
    %v91 = vsub.s32 0, %v90
    %v92 = vrot.slane %v73, %v91
    %v93 = vlaneseq
    %v94 = vshrl.u32 %v93, 7
    %v95 = vsub.s32 0, %v94
    %v96 = vrot.slane %v81, %v95
    %v97 = vlaneseq
    %v98 = vshrl.u32 %v97, 7
    %v99 = vsub.s32 0, %v98
    %v100 = vrot.slane %v83, %v99
    %v101 = vlaneseq
    %v102 = vshrl.u32 %v101, 7
    %v103 = vsub.s32 0, %v102
    %v104 = vrot.slane %v66, %v103
    %v105 = vlaneseq
    %v106 = vshrl.u32 %v105, 7
    %v107 = vsub.s32 0, %v106
    %v108 = vrot.slane %v80, %v107
    %v109 = vlaneseq
    %v110 = vshrl.u32 %v109, 7
    %v111 = vsub.s32 0, %v110
    %v112 = vrot.slane %v82, %v111
    %v113 = vlaneseq
    %v114 = vshrl.u32 %v113, 7
    %v115 = vsub.s32 0, %v114
    %v116 = vrot.slane %v84, %v115
    %v125 = vadd.f32 %v26, %v88
    %v126 = vadd.f32 %v27, %v92
    %v127 = vadd.f32 %v28, %v96
    %v128 = vadd.f32 %v29, %v100
    %v129 = vadd.f32 %v30, %v104
    %v130 = vadd.f32 %v31, %v108
    %v131 = vadd.f32 %v32, %v112
    %v132 = vadd.f32 %v33, %v116
    %133 = vst [vmem:[#allocation5] sm:$0xff] %v125
    %134 = vst [vmem:[#allocation5 + $0x8] sm:$0xff] %v126
    %135 = vst [vmem:[#allocation5 + $0x10] sm:$0xff] %v127
    %136 = vst [vmem:[#allocation5 + $0x18] sm:$0xff] %v128
    %137 = vst [vmem:[#allocation5 + $0x20] sm:$0xff] %v129
    %138 = vst [vmem:[#allocation5 + $0x28] sm:$0xff] %v130
    %139 = vst [vmem:[#allocation5 + $0x30] sm:$0xff] %v131
    %140 = vst [vmem:[#allocation5 + $0x38] sm:$0xff] %v132
    // Predicated region
    $region14: #{pos_encoder_forward.1} parent=1 // pred_check
      _
    $region15: #{pos_encoder_forward.1} parent=1 // pred_check_branch
      %142 = sbr.rel (0) target = $region17
    $region16: #{pos_encoder_forward.1} parent=1 // pred_region
      %s144 = ssub.s32 1024, 1024
      %145 = vsyncadd [#allocation4], %s144
      %s146 = sshll.u32 [#allocation5], 4
      %s147 = int_to_ptr.vmem [resolvable:$true] %s146
      %152 = dma.vmem_to_hbm [thread:$0]  %s147, 1024, %s2, [#allocation4], 128, 128, 8
    $region17: #{pos_encoder_forward.1} parent=1 // pred_fallthru
      _
    // Predicated region
    $region18: #{pos_encoder_forward.1} parent=1 // pred_check
      _
    $region19: #{pos_encoder_forward.1} parent=1 // pred_check_branch
      %154 = sbr.rel (0) target = $region21
    $region20: #{pos_encoder_forward.1} parent=1 // pred_region
      %155 = dma.done [#allocation4], 1024
    $region21: #{pos_encoder_forward.1} parent=1 // pred_fallthru
      _
    %156 = vsyncpa [#allocation3], 1
    %157 = vsyncpa [#allocation4], 1

</llo_original>
